<compile_context>
chip_gen: v6e
topology: v6e:2x2x1
jax: 0.10.0
libtpu: 0.0.40
codegen_flags: <defaults>
</compile_context>

<pallas_src>
import jax
import jax.numpy as jnp
from jax import lax
from jax.experimental import pallas as pl
from jax.experimental.pallas import tpu as pltpu


SYMBOL_LENGTH = 32
BIT_LENGTH = 29
NODE_LIST = (32, 64, 128)


def make_mlp_kernel(batch_block: int):
    """Per-grid-step body: `batch_block` independent rows of the MLP with
    features on sublanes and tokens on lanes (each layer is W^T @ X)."""

    def mlp_kernel(x_ref,
                   w1_ref, b1_ref,
                   w2_ref, b2_ref,
                   w3_ref, b3_ref,
                   w4_ref, b4_ref,
                   out_ref):
        # x_ref block: (Bb, 32, TT) f32.  w*_ref: (out, in) in the matmul dtype
        # (pre-cast in the wrapper).  b*_ref: (out, 1) f32.
        def dense(h, w_ref, b_ref):
            w = w_ref[...]
            y = jnp.dot(w, h.astype(w.dtype),
                        preferred_element_type=jnp.float32)   # f32 accumulation
            return y + b_ref[...]                             # f32 epilogue

        def one_row(i, carry):
            h = x_ref[i].astype(jnp.float32)                   # (32, TT)
            h = jnp.maximum(dense(h, w1_ref, b1_ref), 0.0)     # (32, TT)
            h = jnp.maximum(dense(h, w2_ref, b2_ref), 0.0)     # (64, TT)
            h = jnp.maximum(dense(h, w3_ref, b3_ref), 0.0)     # (128, TT)
            h = dense(h, w4_ref, b4_ref)                       # (29, TT)
            out_ref[i] = jax.nn.sigmoid(h).astype(out_ref.dtype)
            return carry

        if batch_block == 1:
            one_row(0, None)
        else:
            lax.fori_loop(0, batch_block, one_row, None, unroll=True)

    return mlp_kernel


def _round_up(x, m):
    return (x + m - 1) // m * m


def _choose_tiling(B, T, max_lane_tile=8192, lane_budget=8192):
    """Pick (token_tile, batch_block):
       - token tiles up to 8192 lanes (multiple of 128, or full T),
       - batch blocking to amortize grid-step overhead for small T,
       - guarantee >=2 grid steps whenever there is more than one tile of work
         so v7x's two TensorCores both get shards."""
    tt = T if T <= max_lane_tile else max_lane_tile
    # v7x megacore: if the batch axis can't provide >=2 parallel steps, split
    # the token axis (multiple of 128 keeps lane stores dense).
    if B == 1 and T > 256:
        tt = min(tt, _round_up(pl.cdiv(T, 2), 128))
    # Batch blocking: merge several rows per grid step when token tiles are small.
    bb = max(1, min(B, lane_budget // max(tt, 1)))
    while B % bb:
        bb -= 1
    # Keep at least 2 total grid steps if there is more than one row of work.
    if bb == B and B > 1 and pl.cdiv(T, tt) == 1:
        bb = max(1, B // 2)
        while B % bb:
            bb -= 1
    return tt, bb


def _mlp_pallas(x, flat_params, bit_length, tt, bb):
    """x: (B, D, T) f32 -> (B, bit_length, T) f32 via the Pallas kernel."""
    B, D, T = x.shape
    grid = (B // bb, pl.cdiv(T, tt))

    x_spec = pl.BlockSpec((bb, D, tt), lambda b, t: (b, 0, t))
    out_spec = pl.BlockSpec((bb, bit_length, tt), lambda b, t: (b, 0, t))
    # Constant block index -> params stay pinned in VMEM across grid steps.
    param_specs = [pl.BlockSpec(p.shape, lambda b, t: (0, 0)) for p in flat_params]

    # Honest VMEM budget: double-buffered x/out tiles + resident (double-
    # buffered) params + peak live intermediates for one row (~285 live
    # sublanes, rounded up to 320), plus headroom.
    elt = 4
    x_bytes = 2 * bb * _round_up(D, 8) * tt * elt
    o_bytes = 2 * bb * _round_up(bit_length, 8) * tt * elt
    inter_bytes = 320 * tt * elt
    param_bytes = 2 * (512 << 10)
    vmem_limit = x_bytes + o_bytes + inter_bytes + param_bytes + (4 << 20)
    vmem_limit = int(min(max(vmem_limit, 16 << 20), 48 << 20))  # <=48 MiB: safe on v7x

    return pl.pallas_call(
        make_mlp_kernel(bb),
        out_shape=jax.ShapeDtypeStruct((B, bit_length, T), jnp.float32),
        grid_spec=pltpu.PrefetchScalarGridSpec(
            num_scalar_prefetch=0,
            grid=grid,
            in_specs=[x_spec] + param_specs,
            out_specs=out_spec,
        ),
        compiler_params=pltpu.CompilerParams(
            dimension_semantics=("parallel", "parallel"),
            vmem_limit_bytes=vmem_limit,
        ),
    )(x, *flat_params)


def linear_classifier_forward(inputs, params, symbol_length=32, bit_length=29,
                              use_bf16_matmul=True):
    """inputs: (B, symbol_length * T) f32 -> (B, bit_length * T) f32.

    bf16 MXU inputs (f32 accumulation) are the default on every TPU
    generation; the kernel is MXU-pass-bound so f32 matmul inputs only add
    MXU passes.  Set use_bf16_matmul=False for a bit-tighter numerics check.
    """
    B, L = inputs.shape
    assert L % symbol_length == 0
    T = L // symbol_length
    mm_dtype = jnp.bfloat16 if use_bf16_matmul else jnp.float32

    # Pre-transpose and pre-cast the (tiny) weights once: (in,out)->(out,in)
    # in the matmul dtype; biases stay f32 as (out, 1) for the f32 epilogue.
    flat_params = []
    for w, b in params:
        flat_params.append(jnp.asarray(w, jnp.float32).T.astype(mm_dtype))
        flat_params.append(jnp.asarray(b, jnp.float32).reshape(-1, 1))

    if T < 128:
        # Lane-fill path: T alone underfills the 128-lane vreg axis (masked
        # partial stores, poor MXU N-streams).  Merge batch and token onto the
        # lane axis with one cheap wrapper transpose.
        x = inputs.reshape(B, symbol_length, T).transpose(1, 0, 2)
        x = x.reshape(1, symbol_length, B * T)
        tt, bb = _choose_tiling(1, B * T)
        out = _mlp_pallas(x, flat_params, bit_length, tt, bb)    # (1, bit, B*T)
        out = out.reshape(bit_length, B, T).transpose(1, 0, 2)   # (B, bit, T)
        return out.reshape(B, bit_length * T)

    # Natural-layout path: 'B (D T) -> B D T' is a free view; tokens on lanes.
    x = inputs.reshape(B, symbol_length, T)
    tt, bb = _choose_tiling(B, T)
    out = _mlp_pallas(x, flat_params, bit_length, tt, bb)        # (B, bit, T)
    # 'B T D -> B (D T)' on the (B, bit, T) layout is again a free view.
    return out.reshape(B, bit_length * T)


def init_params(key, symbol_length=32, bit_length=29, node_list=(32, 64, 128)):
    """Deterministic PyTorch-style init. Weights stored (in, out); biases (1, out)."""
    dims = [symbol_length] + list(node_list) + [bit_length]
    params = []
    for i in range(len(dims) - 1):
        fan_in, fan_out = dims[i], dims[i + 1]
        key, kw, kb = jax.random.split(key, 3)
        bound = 1.0 / (fan_in ** 0.5)
        w = jax.random.uniform(kw, (fan_in, fan_out), jnp.float32, -bound, bound)
        b = jax.random.uniform(kb, (1, fan_out), jnp.float32, -bound, bound)
        params.append((w, b))
    return params


def reference_forward(inputs, params, symbol_length=32, bit_length=29):
    B, L = inputs.shape
    T = L // symbol_length
    x = inputs.reshape(B, symbol_length, T).transpose(0, 2, 1)
    for i, (w, b) in enumerate(params):
        x = x @ w + b
        x = jnp.maximum(x, 0.0) if i < len(params) - 1 else jax.nn.sigmoid(x)
    return x.transpose(0, 2, 1).reshape(B, bit_length * T)


if __name__ == "__main__":
    key = jax.random.PRNGKey(0)
    key, kx = jax.random.split(key)
    params = init_params(key, SYMBOL_LENGTH, BIT_LENGTH, NODE_LIST)

    # Small demo shape (exercises the lane-fill T<128 path): B=2, T=8.
    B, T = 2, 8
    x = jax.random.normal(kx, (B, SYMBOL_LENGTH * T), dtype=jnp.float32)
    ref = reference_forward(x, params, SYMBOL_LENGTH, BIT_LENGTH)

    # Default bf16 MXU path.
    out = linear_classifier_forward(x, params, SYMBOL_LENGTH, BIT_LENGTH)
    out = jax.block_until_ready(out)
    assert out.shape == (B, BIT_LENGTH * T), out.shape
    assert jnp.allclose(out, ref, atol=2e-2, rtol=0.0), "bf16 kernel mismatch vs reference"

    # f32 matmul-input path (tight numerics check).
    out_f32 = linear_classifier_forward(x, params, SYMBOL_LENGTH, BIT_LENGTH,
                                        use_bf16_matmul=False)
    out_f32 = jax.block_until_ready(out_f32)
    assert jnp.allclose(out_f32, ref, atol=1e-4, rtol=1e-4), "f32 kernel mismatch vs reference"

    # Moderate shape (exercises the tiled / batch-blocked T>=128 path): B=4, T=256.
    key, kx2 = jax.random.split(key)
    B2, T2 = 4, 256
    x2 = jax.random.normal(kx2, (B2, SYMBOL_LENGTH * T2), dtype=jnp.float32)
    ref2 = reference_forward(x2, params, SYMBOL_LENGTH, BIT_LENGTH)
    out2 = jax.block_until_ready(
        linear_classifier_forward(x2, params, SYMBOL_LENGTH, BIT_LENGTH))
    assert out2.shape == (B2, BIT_LENGTH * T2), out2.shape
    assert jnp.allclose(out2, ref2, atol=2e-2, rtol=0.0), "tiled-path kernel mismatch"

    print("KERNEL_OK")
</pallas_src>

<mosaic_0001>
module attributes {stable_mosaic.version = 11 : i64} {
  func.func @mlp_kernel(%arg0: i32, %arg1: i32, %arg2: memref<1x32x16xf32, #tpu.memory_space<vmem>>, %arg3: memref<32x32xbf16, #tpu.memory_space<vmem>>, %arg4: memref<32x1xf32, #tpu.memory_space<vmem>>, %arg5: memref<64x32xbf16, #tpu.memory_space<vmem>>, %arg6: memref<64x1xf32, #tpu.memory_space<vmem>>, %arg7: memref<128x64xbf16, #tpu.memory_space<vmem>>, %arg8: memref<128x1xf32, #tpu.memory_space<vmem>>, %arg9: memref<29x128xbf16, #tpu.memory_space<vmem>>, %arg10: memref<29x1xf32, #tpu.memory_space<vmem>>, %arg11: memref<1x29x16xf32, #tpu.memory_space<vmem>>) attributes {dimension_semantics = [#tpu.dimension_semantics<parallel>, #tpu.dimension_semantics<parallel>], iteration_bounds = array<i64: 1, 1>, scalar_prefetch = 0 : i64, scratch_operands = 0 : i64, tpu.core_type = #tpu.core_type<tc>, window_params = [{transform_indices = @transform_0, window_bounds = array<i64: 1, 32, 16>}, {pipeline_mode = #tpu.pipeline_mode<synchronous>, transform_indices = @transform_1, window_bounds = array<i64: 32, 32>}, {pipeline_mode = #tpu.pipeline_mode<synchronous>, transform_indices = @transform_2, window_bounds = array<i64: 32, 1>}, {pipeline_mode = #tpu.pipeline_mode<synchronous>, transform_indices = @transform_3, window_bounds = array<i64: 64, 32>}, {pipeline_mode = #tpu.pipeline_mode<synchronous>, transform_indices = @transform_4, window_bounds = array<i64: 64, 1>}, {pipeline_mode = #tpu.pipeline_mode<synchronous>, transform_indices = @transform_5, window_bounds = array<i64: 128, 64>}, {pipeline_mode = #tpu.pipeline_mode<synchronous>, transform_indices = @transform_6, window_bounds = array<i64: 128, 1>}, {pipeline_mode = #tpu.pipeline_mode<synchronous>, transform_indices = @transform_7, window_bounds = array<i64: 29, 128>}, {pipeline_mode = #tpu.pipeline_mode<synchronous>, transform_indices = @transform_8, window_bounds = array<i64: 29, 1>}, {transform_indices = @transform_9, window_bounds = array<i64: 1, 29, 16>}]} {
    %c0 = arith.constant 0 : index
    %c0_0 = arith.constant 0 : index
    %c0_1 = arith.constant 0 : index
    %0 = vector.load %arg2[%c0, %c0_0, %c0_1] : memref<1x32x16xf32, #tpu.memory_space<vmem>>, vector<1x32x16xf32>
    %1 = vector.shape_cast %0 : vector<1x32x16xf32> to vector<32x16xf32>
    %c0_2 = arith.constant 0 : index
    %c0_3 = arith.constant 0 : index
    %2 = vector.load %arg3[%c0_2, %c0_3] : memref<32x32xbf16, #tpu.memory_space<vmem>>, vector<32x32xbf16>
    %3 = arith.truncf %1 : vector<32x16xf32> to vector<32x16xbf16>
    %cst = arith.constant dense<0.000000e+00> : vector<32x16xf32>
    %4 = tpu.matmul %2, %3, %cst {dimension_numbers = #tpu.dot_dimension_numbers<[1], [0], [0], [1], [0, 0, 1, 1], [], []>} : vector<32x32xbf16>, vector<32x16xbf16>, vector<32x16xf32> -> vector<32x16xf32>
    %c0_4 = arith.constant 0 : index
    %c0_5 = arith.constant 0 : index
    %5 = vector.load %arg4[%c0_4, %c0_5] : memref<32x1xf32, #tpu.memory_space<vmem>>, vector<32x1xf32>
    %6 = vector.broadcast %5 : vector<32x1xf32> to vector<32x16xf32>
    %7 = arith.addf %4, %6 : vector<32x16xf32>
    %cst_6 = arith.constant 0.000000e+00 : f32
    %8 = vector.broadcast %cst_6 : f32 to vector<32x16xf32>
    %9 = arith.maximumf %7, %8 : vector<32x16xf32>
    %c0_7 = arith.constant 0 : index
    %c0_8 = arith.constant 0 : index
    %10 = vector.load %arg5[%c0_7, %c0_8] : memref<64x32xbf16, #tpu.memory_space<vmem>>, vector<64x32xbf16>
    %11 = arith.truncf %9 : vector<32x16xf32> to vector<32x16xbf16>
    %cst_9 = arith.constant dense<0.000000e+00> : vector<64x16xf32>
    %12 = tpu.matmul %10, %11, %cst_9 {dimension_numbers = #tpu.dot_dimension_numbers<[1], [0], [0], [1], [0, 0, 1, 1], [], []>} : vector<64x32xbf16>, vector<32x16xbf16>, vector<64x16xf32> -> vector<64x16xf32>
    %c0_10 = arith.constant 0 : index
    %c0_11 = arith.constant 0 : index
    %13 = vector.load %arg6[%c0_10, %c0_11] : memref<64x1xf32, #tpu.memory_space<vmem>>, vector<64x1xf32>
    %14 = vector.broadcast %13 : vector<64x1xf32> to vector<64x16xf32>
    %15 = arith.addf %12, %14 : vector<64x16xf32>
    %cst_12 = arith.constant 0.000000e+00 : f32
    %16 = vector.broadcast %cst_12 : f32 to vector<64x16xf32>
    %17 = arith.maximumf %15, %16 : vector<64x16xf32>
    %c0_13 = arith.constant 0 : index
    %c0_14 = arith.constant 0 : index
    %18 = vector.load %arg7[%c0_13, %c0_14] : memref<128x64xbf16, #tpu.memory_space<vmem>>, vector<128x64xbf16>
    %19 = arith.truncf %17 : vector<64x16xf32> to vector<64x16xbf16>
    %cst_15 = arith.constant dense<0.000000e+00> : vector<128x16xf32>
    %20 = tpu.matmul %18, %19, %cst_15 {dimension_numbers = #tpu.dot_dimension_numbers<[1], [0], [0], [1], [0, 0, 1, 1], [], []>} : vector<128x64xbf16>, vector<64x16xbf16>, vector<128x16xf32> -> vector<128x16xf32>
    %c0_16 = arith.constant 0 : index
    %c0_17 = arith.constant 0 : index
    %21 = vector.load %arg8[%c0_16, %c0_17] : memref<128x1xf32, #tpu.memory_space<vmem>>, vector<128x1xf32>
    %22 = vector.broadcast %21 : vector<128x1xf32> to vector<128x16xf32>
    %23 = arith.addf %20, %22 : vector<128x16xf32>
    %cst_18 = arith.constant 0.000000e+00 : f32
    %24 = vector.broadcast %cst_18 : f32 to vector<128x16xf32>
    %25 = arith.maximumf %23, %24 : vector<128x16xf32>
    %c0_19 = arith.constant 0 : index
    %c0_20 = arith.constant 0 : index
    %26 = vector.load %arg9[%c0_19, %c0_20] : memref<29x128xbf16, #tpu.memory_space<vmem>>, vector<29x128xbf16>
    %27 = arith.truncf %25 : vector<128x16xf32> to vector<128x16xbf16>
    %cst_21 = arith.constant dense<0.000000e+00> : vector<29x16xf32>
    %28 = tpu.matmul %26, %27, %cst_21 {dimension_numbers = #tpu.dot_dimension_numbers<[1], [0], [0], [1], [0, 0, 1, 1], [], []>} : vector<29x128xbf16>, vector<128x16xbf16>, vector<29x16xf32> -> vector<29x16xf32>
    %c0_22 = arith.constant 0 : index
    %c0_23 = arith.constant 0 : index
    %29 = vector.load %arg10[%c0_22, %c0_23] : memref<29x1xf32, #tpu.memory_space<vmem>>, vector<29x1xf32>
    %30 = vector.broadcast %29 : vector<29x1xf32> to vector<29x16xf32>
    %31 = arith.addf %28, %30 : vector<29x16xf32>
    %32 = arith.negf %31 : vector<29x16xf32>
    %33 = math.exp %32 : vector<29x16xf32>
    %cst_24 = arith.constant 1.000000e+00 : f32
    %34 = vector.broadcast %cst_24 : f32 to vector<29x16xf32>
    %35 = arith.addf %34, %33 : vector<29x16xf32>
    %36 = arith.divf %34, %35 : vector<29x16xf32>
    %c0_25 = arith.constant 0 : index
    %c0_26 = arith.constant 0 : index
    %c0_27 = arith.constant 0 : index
    %37 = vector.load %arg11[%c0_25, %c0_26, %c0_27] : memref<1x29x16xf32, #tpu.memory_space<vmem>>, vector<1x29x16xf32>
    %38 = vector.shape_cast %37 : vector<1x29x16xf32> to vector<29x16xf32>
    %39 = vector.shape_cast %36 : vector<29x16xf32> to vector<1x29x16xf32>
    tpu.vector_store %arg11[%c0_25, %c0_26, %c0_27], %39 {strides = array<i32>} : memref<1x29x16xf32, #tpu.memory_space<vmem>>, vector<1x29x16xf32>,
    return
  }
  func.func @transform_0(%arg0: i32, %arg1: i32) -> (i32, i32, i32) {
    %c0_i32 = arith.constant 0 : i32
    %c0_i32_0 = arith.constant 0 : i32
    return %arg0, %c0_i32, %arg1 : i32, i32, i32
  }
  func.func @transform_1(%arg0: i32, %arg1: i32) -> (i32, i32) {
    %c0_i32 = arith.constant 0 : i32
    %c0_i32_0 = arith.constant 0 : i32
    %c0_i32_1 = arith.constant 0 : i32
    return %c0_i32, %c0_i32_0 : i32, i32
  }
  func.func @transform_2(%arg0: i32, %arg1: i32) -> (i32, i32) {
    %c0_i32 = arith.constant 0 : i32
    %c0_i32_0 = arith.constant 0 : i32
    %c0_i32_1 = arith.constant 0 : i32
    return %c0_i32, %c0_i32_0 : i32, i32
  }
  func.func @transform_3(%arg0: i32, %arg1: i32) -> (i32, i32) {
    %c0_i32 = arith.constant 0 : i32
    %c0_i32_0 = arith.constant 0 : i32
    %c0_i32_1 = arith.constant 0 : i32
    return %c0_i32, %c0_i32_0 : i32, i32
  }
  func.func @transform_4(%arg0: i32, %arg1: i32) -> (i32, i32) {
    %c0_i32 = arith.constant 0 : i32
    %c0_i32_0 = arith.constant 0 : i32
    %c0_i32_1 = arith.constant 0 : i32
    return %c0_i32, %c0_i32_0 : i32, i32
  }
  func.func @transform_5(%arg0: i32, %arg1: i32) -> (i32, i32) {
    %c0_i32 = arith.constant 0 : i32
    %c0_i32_0 = arith.constant 0 : i32
    %c0_i32_1 = arith.constant 0 : i32
    return %c0_i32, %c0_i32_0 : i32, i32
  }
  func.func @transform_6(%arg0: i32, %arg1: i32) -> (i32, i32) {
    %c0_i32 = arith.constant 0 : i32
    %c0_i32_0 = arith.constant 0 : i32
    %c0_i32_1 = arith.constant 0 : i32
    return %c0_i32, %c0_i32_0 : i32, i32
  }
  func.func @transform_7(%arg0: i32, %arg1: i32) -> (i32, i32) {
    %c0_i32 = arith.constant 0 : i32
    %c0_i32_0 = arith.constant 0 : i32
    %c0_i32_1 = arith.constant 0 : i32
    return %c0_i32, %c0_i32_0 : i32, i32
  }
  func.func @transform_8(%arg0: i32, %arg1: i32) -> (i32, i32) {
    %c0_i32 = arith.constant 0 : i32
    %c0_i32_0 = arith.constant 0 : i32
    %c0_i32_1 = arith.constant 0 : i32
    return %c0_i32, %c0_i32_0 : i32, i32
  }
  func.func @transform_9(%arg0: i32, %arg1: i32) -> (i32, i32, i32) {
    %c0_i32 = arith.constant 0 : i32
    %c0_i32_0 = arith.constant 0 : i32
    return %arg0, %c0_i32, %arg1 : i32, i32, i32
  }
}

</mosaic_0001>

<llo_original>
// kernel: tpu_custom_call.1
$region0: #{tpu_custom_call.1}
  #allocation0 [shape = 'u32[]', space=smem, size = 0x4, offset = 0x4, fixed_abs, tag = 'smem constant byte address 0x4 - core index']
  #allocation1 [shape = 'u32[144,128]{1,0:T(1,128)}', space=vmem, size = 0x12000, scoped, tag = 'internal scratch']
  %s0 = inlined_call_operand.vmem [shape: f32[1,32,16], index: 0, kind: input, shape index: {}]
  %s1 = inlined_call_operand.vmem [shape: bf16[32,32], index: 1, kind: input, shape index: {}]
  %s2 = inlined_call_operand.vmem [shape: f32[32,1], index: 2, kind: input, shape index: {}]
  %s3 = inlined_call_operand.vmem [shape: bf16[64,32], index: 3, kind: input, shape index: {}]
  %s4 = inlined_call_operand.vmem [shape: f32[64,1], index: 4, kind: input, shape index: {}]
  %s5 = inlined_call_operand.vmem [shape: bf16[128,64], index: 5, kind: input, shape index: {}]
  %s6 = inlined_call_operand.vmem [shape: f32[128,1], index: 6, kind: input, shape index: {}]
  %s7 = inlined_call_operand.vmem [shape: bf16[29,128], index: 7, kind: input, shape index: {}]
  %s8 = inlined_call_operand.vmem [shape: f32[29,1], index: 8, kind: input, shape index: {}]
  %s9 = inlined_call_operand.vmem [shape: f32[1,29,16], index: 9, kind: output, shape index: {}]
  %s10 = sld [smem:[#allocation0]]
  $region46: #{tpu_custom_call.1} parent=0
    _
  %s12 = ssub.s32 1, %s10
  %s13 = scalar_select 0, %s12, %s10
  // Predicated region
  $region2: #{tpu_custom_call.1} parent=0 // pred_check
    _
  $region3: #{tpu_custom_call.1} parent=0 // pred_check_branch
    %15 = sbr.rel (0) target = $region5
  $region4: #{tpu_custom_call.1} parent=0 // pred_region
    _
  $region5: #{tpu_custom_call.1} parent=0 // pred_fallthru
    _
  // Predicated region
  $region6: #{tpu_custom_call.1} parent=0 // pred_check
    _
  $region7: #{tpu_custom_call.1} parent=0 // pred_check_branch
    %17 = sbr.rel (0) target = $region9
  $region8: #{tpu_custom_call.1} parent=0 // pred_region
    _
  $region9: #{tpu_custom_call.1} parent=0 // pred_fallthru
    _
  // Predicated region
  $region10: #{tpu_custom_call.1} parent=0 // pred_check
    _
  $region11: #{tpu_custom_call.1} parent=0 // pred_check_branch
    %19 = sbr.rel (0) target = $region13
  $region12: #{tpu_custom_call.1} parent=0 // pred_region
    _
  $region13: #{tpu_custom_call.1} parent=0 // pred_fallthru
    _
  // Predicated region
  $region14: #{tpu_custom_call.1} parent=0 // pred_check
    _
  $region15: #{tpu_custom_call.1} parent=0 // pred_check_branch
    %21 = sbr.rel (0) target = $region17
  $region16: #{tpu_custom_call.1} parent=0 // pred_region
    _
  $region17: #{tpu_custom_call.1} parent=0 // pred_fallthru
    _
  // Predicated region
  $region18: #{tpu_custom_call.1} parent=0 // pred_check
    _
  $region19: #{tpu_custom_call.1} parent=0 // pred_check_branch
    %23 = sbr.rel (0) target = $region21
  $region20: #{tpu_custom_call.1} parent=0 // pred_region
    _
  $region21: #{tpu_custom_call.1} parent=0 // pred_fallthru
    _
  // Predicated region
  $region22: #{tpu_custom_call.1} parent=0 // pred_check
    _
  $region23: #{tpu_custom_call.1} parent=0 // pred_check_branch
    %25 = sbr.rel (0) target = $region25
  $region24: #{tpu_custom_call.1} parent=0 // pred_region
    _
  $region25: #{tpu_custom_call.1} parent=0 // pred_fallthru
    _
  // Predicated region
  $region26: #{tpu_custom_call.1} parent=0 // pred_check
    _
  $region27: #{tpu_custom_call.1} parent=0 // pred_check_branch
    %27 = sbr.rel (0) target = $region29
  $region28: #{tpu_custom_call.1} parent=0 // pred_region
    _
  $region29: #{tpu_custom_call.1} parent=0 // pred_fallthru
    _
  // Predicated region
  $region30: #{tpu_custom_call.1} parent=0 // pred_check
    _
  $region31: #{tpu_custom_call.1} parent=0 // pred_check_branch
    %29 = sbr.rel (0) target = $region33
  $region32: #{tpu_custom_call.1} parent=0 // pred_region
    _
  $region33: #{tpu_custom_call.1} parent=0 // pred_fallthru
    _
  // Predicated region
  $region34: #{tpu_custom_call.1} parent=0 // pred_check
    _
  $region35: #{tpu_custom_call.1} parent=0 // pred_check_branch
    %31 = sbr.rel (0) target = $region37
  $region36: #{tpu_custom_call.1} parent=0 // pred_region
    _
  $region37: #{tpu_custom_call.1} parent=0 // pred_fallthru
    _
  %v33 = vld [vmem:[%s0] sm:$0xff]
  %v34 = vld [vmem:[%s0 + $0x8] sm:$0xff]
  %v35 = vld [vmem:[%s0 + $0x10] sm:$0xff]
  %v36 = vld [vmem:[%s0 + $0x18] sm:$0xff]
  %v37 = vld [vmem:[%s1] sm:$0xf]
  %v38 = vld [vmem:[%s1 + $0x4] sm:$0xf]
  %v39 = vld [vmem:[%s1 + $0x8] sm:$0xf]
  %v40 = vld [vmem:[%s1 + $0xc] sm:$0xf]
  %v41 = vpack.c.bf16 %v34, %v33
  %v42 = vpack.c.bf16 %v36, %v35
  %v43 = vld [vmem:[%s2] sm:$0xff]
  %v44 = vld [vmem:[%s2 + $0x8] sm:$0xff]
  %v45 = vld [vmem:[%s2 + $0x10] sm:$0xff]
  %v46 = vld [vmem:[%s2 + $0x18] sm:$0xff]
  %48 = vset.pattern.permute.xlu0 0
  %49 = vperm.xlu0 %48, %v43
  %v50 = vpop.permute.xlu0 %49
  %53 = vset.pattern.permute.xlu0 0
  %54 = vperm.xlu0 %53, %v44
  %v55 = vpop.permute.xlu0 %54
  %58 = vset.pattern.permute.xlu0 0
  %59 = vperm.xlu0 %58, %v45
  %v60 = vpop.permute.xlu0 %59
  %63 = vset.pattern.permute.xlu0 0
  %64 = vperm.xlu0 %63, %v46
  %v65 = vpop.permute.xlu0 %64
  %v71 = vunpack.c.l.b16 %v37
  %v72 = vunpack.c.l.b16 %v38
  %v73 = vunpack.c.l.b16 %v39
  %v74 = vunpack.c.l.b16 %v40
  %v75 = vpack.c.b16 %v72, %v71
  %v76 = vpack.c.b16 %v74, %v73
  %vm77 = vcmask 261120
  %v79 = vsel %vm77, %v75, 0
  %v82 = vsel %vm77, %v76, 0
  %84 = vmatprep.subr.bf16.mxu0 0
  %85 = vmatpush1.bf16.msra.mxu0 0
  %86 = vmatprep.subr.bf16.mxu0 0
  %87 = vmatpush1.bf16.msra.mxu0 0
  %88 = vmatprep.subr.bf16.mxu0 0
  %89 = vmatpush1.bf16.msra.mxu0 0
  %90 = vmatprep.subr.bf16.mxu0 0
  %91 = vmatpush1.bf16.msra.mxu0 0
  %92 = vmatprep.subr.bf16.mxu0 0
  %93 = vmatpush1.bf16.msra.mxu0 0
  %94 = vmatprep.subr.bf16.mxu0 0
  %95 = vmatpush1.bf16.msra.mxu0 0
  %96 = vmatprep.subr.bf16.mxu0 0
  %97 = vmatpush1.bf16.msra.mxu0 %v42
  %98 = vmatprep.subr.bf16.mxu0 0
  %99 = vmatpush1.bf16.msra.mxu0 %v41
  %100 = vmatprep.subr.bf16.mxu0 0
  %101 = vmatpush2.bf16.msra.mxu0 0
  %102 = vmatprep.subr.bf16.mxu0 0
  %103 = vmatpush2.bf16.msra.mxu0 0
  %104 = vmatprep.subr.bf16.mxu0 0
  %105 = vmatpush2.bf16.msra.mxu0 0
  %106 = vmatprep.subr.bf16.mxu0 0
  %107 = vmatpush2.bf16.msra.mxu0 0
  %108 = vmatprep.subr.bf16.mxu0 0
  %109 = vmatpush2.bf16.msra.mxu0 0
  %110 = vmatprep.subr.bf16.mxu0 0
  %111 = vmatpush2.bf16.msra.mxu0 0
  %112 = vmatprep.subr.bf16.mxu0 0
  %113 = vmatpush2.bf16.msra.mxu0 0
  %114 = vmatprep.subr.bf16.mxu0 0
  %115 = vmatpush2.bf16.msra.mxu0 0
  %116 = vmatprep.mubr.bf16.mxu0 0
  %117 = vmatmul.mubr.bf16.gmra.mxu0 %v79
  %v118 = vpop.f32.mrf.mxu0
  %v119 = vadd.f32 %v50, %v118
  %v120 = vpop.f32.mrf.mxu0
  %v121 = vpop.f32.mrf.mxu0
  %v122 = vadd.f32 %v55, %v121
  %v123 = vpop.f32.mrf.mxu0
  %124 = vmatprep.mubr.bf16.mxu0 0
  %125 = vmatmul.mubr.bf16.gmra.mxu0 %v82
  %v126 = vpop.f32.mrf.mxu0
  %v127 = vadd.f32 %v60, %v126
  %v128 = vpop.f32.mrf.mxu0
  %v129 = vpop.f32.mrf.mxu0
  %v130 = vadd.f32 %v65, %v129
  %v131 = vpop.f32.mrf.mxu0
  %132 = vdwg.mxu0
  %v133 = vmax.f32 %v119, 0.0
  %v134 = vmax.f32 %v122, 0.0
  %v135 = vmax.f32 %v127, 0.0
  %v136 = vmax.f32 %v130, 0.0
  %v137 = vld [vmem:[%s3] sm:$0xf]
  %v138 = vld [vmem:[%s3 + $0x4] sm:$0xf]
  %v139 = vld [vmem:[%s3 + $0x8] sm:$0xf]
  %v140 = vld [vmem:[%s3 + $0xc] sm:$0xf]
  %v141 = vld [vmem:[%s3 + $0x10] sm:$0xf]
  %v142 = vld [vmem:[%s3 + $0x14] sm:$0xf]
  %v143 = vld [vmem:[%s3 + $0x18] sm:$0xf]
  %v144 = vld [vmem:[%s3 + $0x1c] sm:$0xf]
  %v145 = vpack.c.bf16 %v134, %v133
  %v146 = vpack.c.bf16 %v136, %v135
  %v147 = vld [vmem:[%s4] sm:$0xff]
  %v148 = vld [vmem:[%s4 + $0x8] sm:$0xff]
  %v149 = vld [vmem:[%s4 + $0x10] sm:$0xff]
  %v150 = vld [vmem:[%s4 + $0x18] sm:$0xff]
  %v151 = vld [vmem:[%s4 + $0x20] sm:$0xff]
  %v152 = vld [vmem:[%s4 + $0x28] sm:$0xff]
  %v153 = vld [vmem:[%s4 + $0x30] sm:$0xff]
  %v154 = vld [vmem:[%s4 + $0x38] sm:$0xff]
  %156 = vset.pattern.permute.xlu0 0
  %157 = vperm.xlu0 %156, %v147
  %v158 = vpop.permute.xlu0 %157
  %161 = vset.pattern.permute.xlu0 0
  %162 = vperm.xlu0 %161, %v148
  %v163 = vpop.permute.xlu0 %162
  %166 = vset.pattern.permute.xlu0 0
  %167 = vperm.xlu0 %166, %v149
  %v168 = vpop.permute.xlu0 %167
  %171 = vset.pattern.permute.xlu0 0
  %172 = vperm.xlu0 %171, %v150
  %v173 = vpop.permute.xlu0 %172
  %176 = vset.pattern.permute.xlu0 0
  %177 = vperm.xlu0 %176, %v151
  %v178 = vpop.permute.xlu0 %177
  %181 = vset.pattern.permute.xlu0 0
  %182 = vperm.xlu0 %181, %v152
  %v183 = vpop.permute.xlu0 %182
  %186 = vset.pattern.permute.xlu0 0
  %187 = vperm.xlu0 %186, %v153
  %v188 = vpop.permute.xlu0 %187
  %191 = vset.pattern.permute.xlu0 0
  %192 = vperm.xlu0 %191, %v154
  %v193 = vpop.permute.xlu0 %192
  %v203 = vunpack.c.l.b16 %v137
  %v204 = vunpack.c.l.b16 %v138
  %v205 = vunpack.c.l.b16 %v139
  %v206 = vunpack.c.l.b16 %v140
  %v207 = vunpack.c.l.b16 %v141
  %v208 = vunpack.c.l.b16 %v142
  %v209 = vunpack.c.l.b16 %v143
  %v210 = vunpack.c.l.b16 %v144
  %v211 = vpack.c.b16 %v204, %v203
  %v212 = vpack.c.b16 %v206, %v205
  %v213 = vpack.c.b16 %v208, %v207
  %v214 = vpack.c.b16 %v210, %v209
  %v216 = vsel %vm77, %v211, 0
  %v219 = vsel %vm77, %v212, 0
  %v222 = vsel %vm77, %v213, 0
  %v225 = vsel %vm77, %v214, 0
  %227 = vmatprep.subr.bf16.mxu0 0
  %228 = vmatpush1.bf16.msra.mxu0 0
  %229 = vmatprep.subr.bf16.mxu0 0
  %230 = vmatpush1.bf16.msra.mxu0 0
  %231 = vmatprep.subr.bf16.mxu0 0
  %232 = vmatpush1.bf16.msra.mxu0 0
  %233 = vmatprep.subr.bf16.mxu0 0
  %234 = vmatpush1.bf16.msra.mxu0 0
  %235 = vmatprep.subr.bf16.mxu0 0
  %236 = vmatpush1.bf16.msra.mxu0 0
  %237 = vmatprep.subr.bf16.mxu0 0
  %238 = vmatpush1.bf16.msra.mxu0 0
  %239 = vmatprep.subr.bf16.mxu0 0
  %240 = vmatpush1.bf16.msra.mxu0 %v146
  %241 = vmatprep.subr.bf16.mxu0 0
  %242 = vmatpush1.bf16.msra.mxu0 %v145
  %243 = vmatprep.subr.bf16.mxu0 0
  %244 = vmatpush2.bf16.msra.mxu0 0
  %245 = vmatprep.subr.bf16.mxu0 0
  %246 = vmatpush2.bf16.msra.mxu0 0
  %247 = vmatprep.subr.bf16.mxu0 0
  %248 = vmatpush2.bf16.msra.mxu0 0
  %249 = vmatprep.subr.bf16.mxu0 0
  %250 = vmatpush2.bf16.msra.mxu0 0
  %251 = vmatprep.subr.bf16.mxu0 0
  %252 = vmatpush2.bf16.msra.mxu0 0
  %253 = vmatprep.subr.bf16.mxu0 0
  %254 = vmatpush2.bf16.msra.mxu0 0
  %255 = vmatprep.subr.bf16.mxu0 0
  %256 = vmatpush2.bf16.msra.mxu0 0
  %257 = vmatprep.subr.bf16.mxu0 0
  %258 = vmatpush2.bf16.msra.mxu0 0
  %259 = vmatprep.mubr.bf16.mxu0 0
  %260 = vmatmul.mubr.bf16.gmra.mxu0 %v216
  %v261 = vpop.f32.mrf.mxu0
  %v262 = vadd.f32 %v158, %v261
  %v263 = vpop.f32.mrf.mxu0
  %v264 = vpop.f32.mrf.mxu0
  %v265 = vadd.f32 %v163, %v264
  %v266 = vpop.f32.mrf.mxu0
  %267 = vmatprep.mubr.bf16.mxu0 0
  %268 = vmatmul.mubr.bf16.gmra.mxu0 %v219
  %v269 = vpop.f32.mrf.mxu0
  %v270 = vadd.f32 %v168, %v269
  %v271 = vpop.f32.mrf.mxu0
  %v272 = vpop.f32.mrf.mxu0
  %v273 = vadd.f32 %v173, %v272
  %v274 = vpop.f32.mrf.mxu0
  %275 = vmatprep.mubr.bf16.mxu0 0
  %276 = vmatmul.mubr.bf16.gmra.mxu0 %v222
  %v277 = vpop.f32.mrf.mxu0
  %v278 = vadd.f32 %v178, %v277
  %v279 = vpop.f32.mrf.mxu0
  %v280 = vpop.f32.mrf.mxu0
  %v281 = vadd.f32 %v183, %v280
  %v282 = vpop.f32.mrf.mxu0
  %283 = vmatprep.mubr.bf16.mxu0 0
  %284 = vmatmul.mubr.bf16.gmra.mxu0 %v225
  %v285 = vpop.f32.mrf.mxu0
  %v286 = vadd.f32 %v188, %v285
  %v287 = vpop.f32.mrf.mxu0
  %v288 = vpop.f32.mrf.mxu0
  %v289 = vadd.f32 %v193, %v288
  %v290 = vpop.f32.mrf.mxu0
  %291 = vdwg.mxu0
  %v292 = vmax.f32 %v262, 0.0
  %v293 = vmax.f32 %v265, 0.0
  %v294 = vmax.f32 %v270, 0.0
  %v295 = vmax.f32 %v273, 0.0
  %v296 = vmax.f32 %v278, 0.0
  %v297 = vmax.f32 %v281, 0.0
  %v298 = vmax.f32 %v286, 0.0
  %v299 = vmax.f32 %v289, 0.0
  %v300 = vld [vmem:[%s5] sm:$0xf]
  %v301 = vld [vmem:[%s5 + $0x4] sm:$0xf]
  %v302 = vld [vmem:[%s5 + $0x8] sm:$0xf]
  %v303 = vld [vmem:[%s5 + $0xc] sm:$0xf]
  %v304 = vld [vmem:[%s5 + $0x10] sm:$0xf]
  %v305 = vld [vmem:[%s5 + $0x14] sm:$0xf]
  %v306 = vld [vmem:[%s5 + $0x18] sm:$0xf]
  %v307 = vld [vmem:[%s5 + $0x1c] sm:$0xf]
  %v308 = vld [vmem:[%s5 + $0x20] sm:$0xf]
  %v309 = vld [vmem:[%s5 + $0x24] sm:$0xf]
  %v310 = vld [vmem:[%s5 + $0x28] sm:$0xf]
  %v311 = vld [vmem:[%s5 + $0x2c] sm:$0xf]
  %v312 = vld [vmem:[%s5 + $0x30] sm:$0xf]
  %v313 = vld [vmem:[%s5 + $0x34] sm:$0xf]
  %v314 = vld [vmem:[%s5 + $0x38] sm:$0xf]
  %v315 = vld [vmem:[%s5 + $0x3c] sm:$0xf]
  %v316 = vpack.c.bf16 %v293, %v292
  %v317 = vpack.c.bf16 %v295, %v294
  %v318 = vpack.c.bf16 %v297, %v296
  %v319 = vpack.c.bf16 %v299, %v298
  %v320 = vld [vmem:[%s6] sm:$0xff]
  %v321 = vld [vmem:[%s6 + $0x8] sm:$0xff]
  %v322 = vld [vmem:[%s6 + $0x10] sm:$0xff]
  %v323 = vld [vmem:[%s6 + $0x18] sm:$0xff]
  %v324 = vld [vmem:[%s6 + $0x20] sm:$0xff]
  %v325 = vld [vmem:[%s6 + $0x28] sm:$0xff]
  %v326 = vld [vmem:[%s6 + $0x30] sm:$0xff]
  %v327 = vld [vmem:[%s6 + $0x38] sm:$0xff]
  %v328 = vld [vmem:[%s6 + $0x40] sm:$0xff]
  %v329 = vld [vmem:[%s6 + $0x48] sm:$0xff]
  %v330 = vld [vmem:[%s6 + $0x50] sm:$0xff]
  %v331 = vld [vmem:[%s6 + $0x58] sm:$0xff]
  %v332 = vld [vmem:[%s6 + $0x60] sm:$0xff]
  %v333 = vld [vmem:[%s6 + $0x68] sm:$0xff]
  %v334 = vld [vmem:[%s6 + $0x70] sm:$0xff]
  %v335 = vld [vmem:[%s6 + $0x78] sm:$0xff]
  %337 = vset.pattern.permute.xlu0 0
  %338 = vperm.xlu0 %337, %v320
  %v339 = vpop.permute.xlu0 %338
  %342 = vset.pattern.permute.xlu0 0
  %343 = vperm.xlu0 %342, %v321
  %v344 = vpop.permute.xlu0 %343
  %347 = vset.pattern.permute.xlu0 0
  %348 = vperm.xlu0 %347, %v322
  %v349 = vpop.permute.xlu0 %348
  %352 = vset.pattern.permute.xlu0 0
  %353 = vperm.xlu0 %352, %v323
  %v354 = vpop.permute.xlu0 %353
  %357 = vset.pattern.permute.xlu0 0
  %358 = vperm.xlu0 %357, %v324
  %v359 = vpop.permute.xlu0 %358
  %362 = vset.pattern.permute.xlu0 0
  %363 = vperm.xlu0 %362, %v325
  %v364 = vpop.permute.xlu0 %363
  %367 = vset.pattern.permute.xlu0 0
  %368 = vperm.xlu0 %367, %v326
  %v369 = vpop.permute.xlu0 %368
  %372 = vset.pattern.permute.xlu0 0
  %373 = vperm.xlu0 %372, %v327
  %v374 = vpop.permute.xlu0 %373
  %377 = vset.pattern.permute.xlu0 0
  %378 = vperm.xlu0 %377, %v328
  %v379 = vpop.permute.xlu0 %378
  %382 = vset.pattern.permute.xlu0 0
  %383 = vperm.xlu0 %382, %v329
  %v384 = vpop.permute.xlu0 %383
  %387 = vset.pattern.permute.xlu0 0
  %388 = vperm.xlu0 %387, %v330
  %v389 = vpop.permute.xlu0 %388
  %392 = vset.pattern.permute.xlu0 0
  %393 = vperm.xlu0 %392, %v331
  %v394 = vpop.permute.xlu0 %393
  %397 = vset.pattern.permute.xlu0 0
  %398 = vperm.xlu0 %397, %v332
  %v399 = vpop.permute.xlu0 %398
  %402 = vset.pattern.permute.xlu0 0
  %403 = vperm.xlu0 %402, %v333
  %v404 = vpop.permute.xlu0 %403
  %407 = vset.pattern.permute.xlu0 0
  %408 = vperm.xlu0 %407, %v334
  %v409 = vpop.permute.xlu0 %408
  %412 = vset.pattern.permute.xlu0 0
  %413 = vperm.xlu0 %412, %v335
  %v414 = vpop.permute.xlu0 %413
  %v432 = vunpack.c.l.b16 %v300
  %v433 = vunpack.c.l.b16 %v301
  %v434 = vunpack.c.l.b16 %v302
  %v435 = vunpack.c.l.b16 %v303
  %v436 = vunpack.c.l.b16 %v304
  %v437 = vunpack.c.l.b16 %v305
  %v438 = vunpack.c.l.b16 %v306
  %v439 = vunpack.c.l.b16 %v307
  %v440 = vunpack.c.l.b16 %v308
  %v441 = vunpack.c.l.b16 %v309
  %v442 = vunpack.c.l.b16 %v310
  %v443 = vunpack.c.l.b16 %v311
  %v444 = vunpack.c.l.b16 %v312
  %v445 = vunpack.c.l.b16 %v313
  %v446 = vunpack.c.l.b16 %v314
  %v447 = vunpack.c.l.b16 %v315
  %v448 = vpack.c.b16 %v433, %v432
  %v449 = vpack.c.b16 %v435, %v434
  %v450 = vpack.c.b16 %v437, %v436
  %v451 = vpack.c.b16 %v439, %v438
  %v452 = vpack.c.b16 %v441, %v440
  %v453 = vpack.c.b16 %v443, %v442
  %v454 = vpack.c.b16 %v445, %v444
  %v455 = vpack.c.b16 %v447, %v446
  %vm456 = vcmask 523264
  %v458 = vsel %vm456, %v448, 0
  %v461 = vsel %vm456, %v449, 0
  %v464 = vsel %vm456, %v450, 0
  %v467 = vsel %vm456, %v451, 0
  %v470 = vsel %vm456, %v452, 0
  %v473 = vsel %vm456, %v453, 0
  %v476 = vsel %vm456, %v454, 0
  %v479 = vsel %vm456, %v455, 0
  %481 = vmatprep.subr.bf16.mxu0 0
  %482 = vmatpush1.bf16.msra.mxu0 0
  %483 = vmatprep.subr.bf16.mxu0 0
  %484 = vmatpush1.bf16.msra.mxu0 0
  %485 = vmatprep.subr.bf16.mxu0 0
  %486 = vmatpush1.bf16.msra.mxu0 0
  %487 = vmatprep.subr.bf16.mxu0 0
  %488 = vmatpush1.bf16.msra.mxu0 0
  %489 = vmatprep.subr.bf16.mxu0 0
  %490 = vmatpush1.bf16.msra.mxu0 %v319
  %491 = vmatprep.subr.bf16.mxu0 0
  %492 = vmatpush1.bf16.msra.mxu0 %v318
  %493 = vmatprep.subr.bf16.mxu0 0
  %494 = vmatpush1.bf16.msra.mxu0 %v317
  %495 = vmatprep.subr.bf16.mxu0 0
  %496 = vmatpush1.bf16.msra.mxu0 %v316
  %497 = vmatprep.subr.bf16.mxu0 0
  %498 = vmatpush2.bf16.msra.mxu0 0
  %499 = vmatprep.subr.bf16.mxu0 0
  %500 = vmatpush2.bf16.msra.mxu0 0
  %501 = vmatprep.subr.bf16.mxu0 0
  %502 = vmatpush2.bf16.msra.mxu0 0
  %503 = vmatprep.subr.bf16.mxu0 0
  %504 = vmatpush2.bf16.msra.mxu0 0
  %505 = vmatprep.subr.bf16.mxu0 0
  %506 = vmatpush2.bf16.msra.mxu0 0
  %507 = vmatprep.subr.bf16.mxu0 0
  %508 = vmatpush2.bf16.msra.mxu0 0
  %509 = vmatprep.subr.bf16.mxu0 0
  %510 = vmatpush2.bf16.msra.mxu0 0
  %511 = vmatprep.subr.bf16.mxu0 0
  %512 = vmatpush2.bf16.msra.mxu0 0
  %513 = vmatprep.mubr.bf16.mxu0 0
  %514 = vmatmul.mubr.bf16.gmra.mxu0 %v458
  %v515 = vpop.f32.mrf.mxu0
  %v516 = vadd.f32 %v339, %v515
  %v517 = vpop.f32.mrf.mxu0
  %v518 = vpop.f32.mrf.mxu0
  %v519 = vadd.f32 %v344, %v518
  %v520 = vpop.f32.mrf.mxu0
  %521 = vmatprep.mubr.bf16.mxu0 0
  %522 = vmatmul.mubr.bf16.gmra.mxu0 %v461
  %v523 = vpop.f32.mrf.mxu0
  %v524 = vadd.f32 %v349, %v523
  %v525 = vpop.f32.mrf.mxu0
  %v526 = vpop.f32.mrf.mxu0
  %v527 = vadd.f32 %v354, %v526
  %v528 = vpop.f32.mrf.mxu0
  %529 = vmatprep.mubr.bf16.mxu0 0
  %530 = vmatmul.mubr.bf16.gmra.mxu0 %v464
  %v531 = vpop.f32.mrf.mxu0
  %v532 = vadd.f32 %v359, %v531
  %v533 = vpop.f32.mrf.mxu0
  %v534 = vpop.f32.mrf.mxu0
  %v535 = vadd.f32 %v364, %v534
  %v536 = vpop.f32.mrf.mxu0
  %537 = vmatprep.mubr.bf16.mxu0 0
  %538 = vmatmul.mubr.bf16.gmra.mxu0 %v467
  %v539 = vpop.f32.mrf.mxu0
  %v540 = vadd.f32 %v369, %v539
  %v541 = vpop.f32.mrf.mxu0
  %v542 = vpop.f32.mrf.mxu0
  %v543 = vadd.f32 %v374, %v542
  %v544 = vpop.f32.mrf.mxu0
  %545 = vmatprep.mubr.bf16.mxu0 0
  %546 = vmatmul.mubr.bf16.gmra.mxu0 %v470
  %v547 = vpop.f32.mrf.mxu0
  %v548 = vadd.f32 %v379, %v547
  %v549 = vpop.f32.mrf.mxu0
  %v550 = vpop.f32.mrf.mxu0
  %v551 = vadd.f32 %v384, %v550
  %v552 = vpop.f32.mrf.mxu0
  %553 = vmatprep.mubr.bf16.mxu0 0
  %554 = vmatmul.mubr.bf16.gmra.mxu0 %v473
  %v555 = vpop.f32.mrf.mxu0
  %v556 = vadd.f32 %v389, %v555
  %v557 = vpop.f32.mrf.mxu0
  %v558 = vpop.f32.mrf.mxu0
  %v559 = vadd.f32 %v394, %v558
  %v560 = vpop.f32.mrf.mxu0
  %561 = vmatprep.mubr.bf16.mxu0 0
  %562 = vmatmul.mubr.bf16.gmra.mxu0 %v476
  %v563 = vpop.f32.mrf.mxu0
  %v564 = vadd.f32 %v399, %v563
  %v565 = vpop.f32.mrf.mxu0
  %v566 = vpop.f32.mrf.mxu0
  %v567 = vadd.f32 %v404, %v566
  %v568 = vpop.f32.mrf.mxu0
  %569 = vmatprep.mubr.bf16.mxu0 0
  %570 = vmatmul.mubr.bf16.gmra.mxu0 %v479
  %v571 = vpop.f32.mrf.mxu0
  %v572 = vadd.f32 %v409, %v571
  %v573 = vpop.f32.mrf.mxu0
  %v574 = vpop.f32.mrf.mxu0
  %v575 = vadd.f32 %v414, %v574
  %v576 = vpop.f32.mrf.mxu0
  %577 = vdwg.mxu0
  %v578 = vmax.f32 %v516, 0.0
  %v579 = vmax.f32 %v519, 0.0
  %v580 = vmax.f32 %v524, 0.0
  %v581 = vmax.f32 %v527, 0.0
  %v582 = vmax.f32 %v532, 0.0
  %v583 = vmax.f32 %v535, 0.0
  %v584 = vmax.f32 %v540, 0.0
  %v585 = vmax.f32 %v543, 0.0
  %v586 = vmax.f32 %v548, 0.0
  %v587 = vmax.f32 %v551, 0.0
  %v588 = vmax.f32 %v556, 0.0
  %v589 = vmax.f32 %v559, 0.0
  %v590 = vmax.f32 %v564, 0.0
  %v591 = vmax.f32 %v567, 0.0
  %v592 = vmax.f32 %v572, 0.0
  %v593 = vmax.f32 %v575, 0.0
  %v594 = vld [vmem:[%s7] sm:$0xf]
  %v595 = vld [vmem:[%s7 + $0x4] sm:$0xf]
  %v596 = vld [vmem:[%s7 + $0x8] sm:$0xf]
  %v597 = vld [vmem:[%s7 + $0xc] sm:$0x7]
  %v598 = vpack.c.bf16 %v579, %v578
  %v599 = vpack.c.bf16 %v581, %v580
  %v600 = vpack.c.bf16 %v583, %v582
  %v601 = vpack.c.bf16 %v585, %v584
  %v602 = vpack.c.bf16 %v587, %v586
  %v603 = vpack.c.bf16 %v589, %v588
  %v604 = vpack.c.bf16 %v591, %v590
  %v605 = vpack.c.bf16 %v593, %v592
  %v606 = vld [vmem:[%s8] sm:$0xff]
  %v607 = vld [vmem:[%s8 + $0x8] sm:$0xff]
  %v608 = vld [vmem:[%s8 + $0x10] sm:$0xff]
  %v609 = vld [vmem:[%s8 + $0x18] sm:$0x1f]
  %611 = vset.pattern.permute.xlu0 0
  %612 = vperm.xlu0 %611, %v606
  %v613 = vpop.permute.xlu0 %612
  %616 = vset.pattern.permute.xlu0 0
  %617 = vperm.xlu0 %616, %v607
  %v618 = vpop.permute.xlu0 %617
  %621 = vset.pattern.permute.xlu0 0
  %622 = vperm.xlu0 %621, %v608
  %v623 = vpop.permute.xlu0 %622
  %626 = vset.pattern.permute.xlu0 0
  %627 = vperm.xlu0 %626, %v609
  %v628 = vpop.permute.xlu0 %627
  %v634 = vunpack.c.l.b16 %v594
  %v635 = vunpack.c.l.b16 %v595
  %v636 = vunpack.c.l.b16 %v596
  %v637 = vunpack.c.l.b16 %v597
  %v638 = vpack.c.b16 %v635, %v634
  %v639 = vpack.c.b16 %v637, %v636
  %642 = vmatprep.subr.bf16.mxu0 0
  %643 = vmatpush1.bf16.msra.mxu0 %v605
  %644 = vmatprep.subr.bf16.mxu0 0
  %645 = vmatpush1.bf16.msra.mxu0 %v604
  %646 = vmatprep.subr.bf16.mxu0 0
  %647 = vmatpush1.bf16.msra.mxu0 %v603
  %648 = vmatprep.subr.bf16.mxu0 0
  %649 = vmatpush1.bf16.msra.mxu0 %v602
  %650 = vmatprep.subr.bf16.mxu0 0
  %651 = vmatpush1.bf16.msra.mxu0 %v601
  %652 = vmatprep.subr.bf16.mxu0 0
  %653 = vmatpush1.bf16.msra.mxu0 %v600
  %654 = vmatprep.subr.bf16.mxu0 0
  %655 = vmatpush1.bf16.msra.mxu0 %v599
  %656 = vmatprep.subr.bf16.mxu0 0
  %657 = vmatpush1.bf16.msra.mxu0 %v598
  %658 = vmatprep.subr.bf16.mxu0 0
  %659 = vmatpush2.bf16.msra.mxu0 0
  %660 = vmatprep.subr.bf16.mxu0 0
  %661 = vmatpush2.bf16.msra.mxu0 0
  %662 = vmatprep.subr.bf16.mxu0 0
  %663 = vmatpush2.bf16.msra.mxu0 0
  %664 = vmatprep.subr.bf16.mxu0 0
  %665 = vmatpush2.bf16.msra.mxu0 0
  %666 = vmatprep.subr.bf16.mxu0 0
  %667 = vmatpush2.bf16.msra.mxu0 0
  %668 = vmatprep.subr.bf16.mxu0 0
  %669 = vmatpush2.bf16.msra.mxu0 0
  %670 = vmatprep.subr.bf16.mxu0 0
  %671 = vmatpush2.bf16.msra.mxu0 0
  %672 = vmatprep.subr.bf16.mxu0 0
  %673 = vmatpush2.bf16.msra.mxu0 0
  %674 = vmatprep.mubr.bf16.mxu0 0
  %675 = vmatmul.mubr.bf16.gmra.mxu0 %v638
  %v676 = vpop.f32.mrf.mxu0
  %v677 = vadd.f32 %v613, %v676
  %v678 = vpop.f32.mrf.mxu0
  %v679 = vpop.f32.mrf.mxu0
  %v680 = vadd.f32 %v618, %v679
  %v681 = vpop.f32.mrf.mxu0
  %682 = vmatprep.mubr.bf16.mxu0 0
  %683 = vmatmul.mubr.bf16.gmra.mxu0 %v639
  %v684 = vpop.f32.mrf.mxu0
  %v685 = vadd.f32 %v623, %v684
  %v686 = vpop.f32.mrf.mxu0
  %v687 = vpop.f32.mrf.mxu0
  %v688 = vadd.f32 %v628, %v687
  %v689 = vpop.f32.mrf.mxu0
  %690 = vdwg.mxu0
  %v691 = vxor.u32 %v677, 2147483648
  %v692 = vxor.u32 %v680, 2147483648
  %v693 = vxor.u32 %v685, 2147483648
  %v694 = vxor.u32 %v688, 2147483648
  %v695 = vmul.f32 %v691, 1.442695
  %v696 = vpow.pop %v695
  %v697 = vmul.f32 %v692, 1.442695
  %v698 = vpow.pop %v697
  %v699 = vmul.f32 %v693, 1.442695
  %v700 = vpow.pop %v699
  %v701 = vmul.f32 %v694, 1.442695
  %v702 = vpow.pop %v701
  %v703 = vadd.f32 %v696, 1.0
  %v704 = vadd.f32 %v698, 1.0
  %v705 = vadd.f32 %v700, 1.0
  %v706 = vadd.f32 %v702, 1.0
  %v707 = vrcp.pop %v703
  %v708 = vmul.f32 1.0, %v707
  %v709 = vrcp.pop %v704
  %v710 = vmul.f32 1.0, %v709
  %v711 = vrcp.pop %v705
  %v712 = vmul.f32 1.0, %v711
  %v713 = vrcp.pop %v706
  %v714 = vmul.f32 1.0, %v713
  %vm715 = vcmask 130048
  %716 = vst.msk [vmem:[%s9] sm:$0xff] %vm715, %v708
  %717 = vst.msk [vmem:[%s9 + $0x8] sm:$0xff] %vm715, %v710
  %718 = vst.msk [vmem:[%s9 + $0x10] sm:$0xff] %vm715, %v712
  %vm719 = vcmask 126976
  %720 = vst.msk [vmem:[%s9 + $0x18] sm:$0x1f] %vm719, %v714
  // Predicated region
  $region38: #{tpu_custom_call.1} parent=0 // pred_check
    _
  $region39: #{tpu_custom_call.1} parent=0 // pred_check_branch
    %722 = sbr.rel (0) target = $region41
  $region40: #{tpu_custom_call.1} parent=0 // pred_region
    _
  $region41: #{tpu_custom_call.1} parent=0 // pred_fallthru
    _
  // Predicated region
  $region42: #{tpu_custom_call.1} parent=0 // pred_check
    _
  $region43: #{tpu_custom_call.1} parent=0 // pred_check_branch
    %724 = sbr.rel (0) target = $region45
  $region44: #{tpu_custom_call.1} parent=0 // pred_region
    _
  $region45: #{tpu_custom_call.1} parent=0 // pred_fallthru
    _

</llo_original>
